<compile_context>
chip_gen: v5e
topology: v5e:2x2
jax: 0.10.0
libtpu: 0.0.40
codegen_flags: <defaults>
</compile_context>

<pallas_src>
import numpy as np
import jax
import jax.numpy as jnp
from jax.experimental import pallas as pl
from jax.experimental.pallas import tpu as pltpu

K = 5
STRIDE = 2
PAD = 2
OUT_PAD = 1
EPS = 1e-5
VMEM_LIMIT = 64 * 1024 * 1024


# ---------------------------------------------------------------------------
# Kernels
# ---------------------------------------------------------------------------
def _convt_kernel(x_ref, w_ref, out_ref, sum_ref, ssq_ref):
    """One (image, H-tile) grid cell of the phase-decomposed transposed conv.

    x_ref  : (Ht*W, 9*Cin) bf16 im2col tile (row = a*W+b, col = (dh*3+dw)*Cin+ci)
    w_ref  : (9*Cin, C4p)  bf16 folded weights, col = (ph*2+pw)*Cout+co, zero padded
    out_ref: (Ht*W, C4p)   bf16 conv output tile
    sum/ssq: (1, C4p) f32 per-image partials accumulated over the sequential
             H-tile grid axis (BatchNorm batch statistics).
    """
    acc = jnp.dot(x_ref[...], w_ref[...], preferred_element_type=jnp.float32)
    out_ref[...] = acc.astype(out_ref.dtype)

    @pl.when(pl.program_id(1) == 0)
    def _():
        sum_ref[...] = jnp.zeros_like(sum_ref)
        ssq_ref[...] = jnp.zeros_like(ssq_ref)

    sum_ref[...] += jnp.sum(acc, axis=0, keepdims=True)
    ssq_ref[...] += jnp.sum(acc * acc, axis=0, keepdims=True)


def _bn_relu_kernel(y_ref, scale_ref, shift_ref, o_ref):
    # y_ref: (RB, L) bf16; scale/shift: (1, L) f32; o_ref: (RB, L) f32.
    y = y_ref[...].astype(jnp.float32)
    o_ref[...] = jnp.maximum(y * scale_ref[...] + shift_ref[...], 0.0)


# ---------------------------------------------------------------------------
# Wrapper helpers
# ---------------------------------------------------------------------------
def _fold_weight(w_pt, Cin, Cout, c4p):
    """PyTorch ConvTranspose2d weight (Cin, Cout, K, K) -> (9*Cin, c4p) folded
    matrix with row = (dh*3+dw)*Cin + ci and col = (ph*2+pw)*Cout + co.

    For output (oh, ow) = (2a+ph, 2b+pw), the contributing taps satisfy
    kh = ph + (K-1) - 2*dh and kw = pw + (K-1) - 2*dw with padded-input offset
    (dh, dw) in {0,1,2}^2; out-of-range taps are zero.  Columns beyond 4*Cout
    are zero padding so the matmul N dim / store lane dim is 128-dense."""
    w32 = w_pt.astype(jnp.float32)
    w_blk = jnp.zeros((3, 3, Cin, 2, 2, Cout), jnp.float32)
    for dh in range(3):
        for dw in range(3):
            for ph in range(2):
                for pw in range(2):
                    kh = ph + (K - 1) - 2 * dh
                    kw = pw + (K - 1) - 2 * dw
                    if 0 <= kh < K and 0 <= kw < K:
                        w_blk = w_blk.at[dh, dw, :, ph, pw, :].set(w32[:, :, kh, kw])
    w_eff = w_blk.reshape(9 * Cin, 4 * Cout)
    if c4p > 4 * Cout:
        w_eff = jnp.pad(w_eff, ((0, 0), (0, c4p - 4 * Cout)))
    return w_eff.astype(jnp.bfloat16)


def _pick_h_tile(H, W, target_rows):
    """Largest Ht dividing H with ~target_rows rows per tile and (Ht*W)%8==0."""
    limit = min(H, max(1, target_rows // max(W, 1)))
    for ht in range(limit, 0, -1):
        if H % ht == 0 and (ht * W) % 8 == 0:
            return ht
    return H  # whole image => full-extent block, always legal


def _pick_lane_width(total, c4p):
    """Lane width for the BN pass: multiple of the channel period c4p (itself a
    multiple of 128) that divides the total element count."""
    for cand in (1024, 512, 256, 128):
        if cand % c4p == 0 and total % cand == 0:
            return cand
    return c4p


def _pick_row_block(R, L):
    """Largest multiple-of-8 divisor of R under a ~2 MiB-f32 per-block cap."""
    cap = max(8, (512 * 1024) // L)
    cap -= cap % 8
    cap = max(cap, 8)
    rb = min(R, cap)
    rb -= rb % 8
    while rb >= 8:
        if R % rb == 0:
            return rb
        rb -= 8
    return R  # full-extent fallback (legal); only hit for tiny/odd R


# ---------------------------------------------------------------------------
# Forward
# ---------------------------------------------------------------------------
def up_block_forward(x_nhwc, w_pt, gamma, beta, *, target_rows=1024):
    """x_nhwc: (N, H, W, Cin) f32; w_pt: (Cin, Cout, 5, 5); gamma/beta: (Cout,).
    Returns NHWC output (N, 2H, 2W, Cout) f32."""
    N, H, W, Cin = x_nhwc.shape
    Cout = w_pt.shape[1]
    C4 = 4 * Cout
    C4p = ((C4 + 127) // 128) * 128      # lane-dense matmul N / store width
    K9 = 9 * Cin
    Ho, Wo = STRIDE * H, STRIDE * W      # (H-1)*2 - 2*2 + 5 + 1 = 2H

    # --- full 3x3 (dh, dw) im2col over the 1-halo-padded input ---------------
    x_pad = jnp.pad(x_nhwc, ((0, 0), (1, 1), (1, 1), (0, 0)))
    xcol = jnp.concatenate(
        [x_pad[:, dh:dh + H, dw:dw + W, :] for dh in range(3) for dw in range(3)],
        axis=-1)
    xcol = xcol.reshape(N, H * W, K9).astype(jnp.bfloat16)

    w_eff = _fold_weight(w_pt, Cin, Cout, C4p)

    Ht = _pick_h_tile(H, W, target_rows)
    T = H // Ht
    rows = Ht * W

    conv_out, ch_sum, ch_ssq = pl.pallas_call(
        _convt_kernel,
        out_shape=(
            jax.ShapeDtypeStruct((N, H * W, C4p), jnp.bfloat16),
            jax.ShapeDtypeStruct((N, 1, C4p), jnp.float32),
            jax.ShapeDtypeStruct((N, 1, C4p), jnp.float32),
        ),
        grid=(N, T),
        in_specs=[
            pl.BlockSpec((None, rows, K9), lambda n, t: (n, t, 0)),
            pl.BlockSpec((K9, C4p), lambda n, t: (0, 0)),
        ],
        out_specs=(
            pl.BlockSpec((None, rows, C4p), lambda n, t: (n, t, 0)),
            pl.BlockSpec((None, 1, C4p), lambda n, t: (n, 0, 0)),
            pl.BlockSpec((None, 1, C4p), lambda n, t: (n, 0, 0)),
        ),
        compiler_params=pltpu.CompilerParams(
            dimension_semantics=("parallel", "arbitrary"),
            vmem_limit_bytes=VMEM_LIMIT),
    )(xcol, w_eff)

    # --- BatchNorm2d batch statistics (training-mode semantics) --------------
    # TODO(synk): running_mean/running_var buffer updates (stateful training
    # side effect) are not materialized; they do not affect the forward output.
    count = float(N * Ho * Wo)
    s_c = jnp.sum(ch_sum, axis=(0, 1))[:C4].reshape(4, Cout).sum(axis=0)
    q_c = jnp.sum(ch_ssq, axis=(0, 1))[:C4].reshape(4, Cout).sum(axis=0)
    mean = s_c / count
    # TODO(synk): single-pass E[x^2]-E[x]^2 in f32; switch to two-pass/Welford
    # if N*Ho*Wo or activation magnitudes become very large.
    var = jnp.maximum(q_c / count - mean * mean, 0.0)
    inv_std = 1.0 / jnp.sqrt(var + EPS)
    scale_c = gamma.astype(jnp.float32) * inv_std
    shift_c = beta.astype(jnp.float32) - mean * scale_c
    scale4 = jnp.concatenate([jnp.tile(scale_c, 4),
                              jnp.zeros((C4p - C4,), jnp.float32)])
    shift4 = jnp.concatenate([jnp.tile(shift_c, 4),
                              jnp.zeros((C4p - C4,), jnp.float32)])

    # --- lane-dense BN + ReLU epilogue ----------------------------------------
    total = N * H * W * C4p
    L = _pick_lane_width(total, C4p)
    reps = L // C4p
    scale_row = jnp.tile(scale4, reps).reshape(1, L)
    shift_row = jnp.tile(shift4, reps).reshape(1, L)
    R = total // L
    RB = _pick_row_block(R, L)
    y2d = conv_out.reshape(R, L)

    out2d = pl.pallas_call(
        _bn_relu_kernel,
        out_shape=jax.ShapeDtypeStruct((R, L), jnp.float32),
        grid=(R // RB,),
        in_specs=[
            pl.BlockSpec((RB, L), lambda i: (i, 0)),
            pl.BlockSpec((1, L), lambda i: (0, 0)),
            pl.BlockSpec((1, L), lambda i: (0, 0)),
        ],
        out_specs=pl.BlockSpec((RB, L), lambda i: (i, 0)),
        compiler_params=pltpu.CompilerParams(
            dimension_semantics=("parallel",),
            vmem_limit_bytes=VMEM_LIMIT),
    )(y2d, scale_row, shift_row)

    # --- strip channel padding and interleave the 4 output phases -------------
    # TODO(synk): this de-interleave (plus pad strip) is one fused XLA copy;
    # folding it into the epilogue kernel's out_specs would save an HBM round
    # trip of the f32 output.
    y = out2d.reshape(N, H * W, C4p)[:, :, :C4].reshape(N, H, W, 2, 2, Cout)
    out = jnp.transpose(y, (0, 1, 3, 2, 4, 5)).reshape(N, Ho, Wo, Cout)
    return out


# ---------------------------------------------------------------------------
# Reference and test
# ---------------------------------------------------------------------------
def _ref_upblock_nchw(x_nchw, w_pt, gamma, beta):
    """Pure-numpy reference reproducing PyTorch UpBlock.forward (training BN)."""
    x = np.asarray(x_nchw, np.float64)
    w = np.asarray(w_pt, np.float64)
    N, Cin, H, W = x.shape
    Cout = w.shape[1]
    Ho, Wo = 2 * H, 2 * W
    out = np.zeros((N, Cout, Ho, Wo), np.float64)
    for n in range(N):
        for ci in range(Cin):
            for ih in range(H):
                for iw in range(W):
                    for kh in range(K):
                        for kw in range(K):
                            oh = ih * STRIDE - PAD + kh
                            ow = iw * STRIDE - PAD + kw
                            if 0 <= oh < Ho and 0 <= ow < Wo:
                                out[n, :, oh, ow] += x[n, ci, ih, iw] * w[ci, :, kh, kw]
    mean = out.mean(axis=(0, 2, 3), keepdims=True)
    var = out.var(axis=(0, 2, 3), keepdims=True)  # biased
    g = np.asarray(gamma, np.float64).reshape(1, -1, 1, 1)
    b = np.asarray(beta, np.float64).reshape(1, -1, 1, 1)
    y = (out - mean) / np.sqrt(var + EPS) * g + b
    return np.maximum(y, 0.0)


if __name__ == "__main__":
    # Small shapes: batch=2, in_c=4, out_c=8, spatial=16 -> output spatial 32.
    N, Cin, Cout, H, W = 2, 4, 8, 16, 16
    key = jax.random.PRNGKey(0)
    k_x, k_w, k_g, k_b = jax.random.split(key, 4)

    x_nchw = jax.random.normal(k_x, (N, Cin, H, W), jnp.float32)
    w_pt = 0.1 * jax.random.normal(k_w, (Cin, Cout, K, K), jnp.float32)
    gamma = 1.0 + 0.1 * jax.random.normal(k_g, (Cout,), jnp.float32)
    beta = 0.1 * jax.random.normal(k_b, (Cout,), jnp.float32)

    x_nhwc = jnp.transpose(x_nchw, (0, 2, 3, 1))
    out_nhwc = jax.block_until_ready(up_block_forward(x_nhwc, w_pt, gamma, beta))

    out_nchw = np.transpose(np.asarray(out_nhwc), (0, 3, 1, 2))
    ref = _ref_upblock_nchw(x_nchw, w_pt, gamma, beta)

    assert out_nchw.shape == (N, Cout, 2 * H, 2 * W), out_nchw.shape
    # bf16 MXU operands + bf16 intermediate conv => relaxed tolerance vs f64 ref.
    np.testing.assert_allclose(out_nchw, ref, rtol=3e-2, atol=3e-2)
    print("KERNEL_OK")
</pallas_src>

<mosaic_0001>
module attributes {stable_mosaic.version = 11 : i64} {
  func.func @_convt_kernel(%arg0: i32, %arg1: i32, %arg2: memref<1x256x36xbf16, #tpu.memory_space<vmem>>, %arg3: memref<36x128xbf16, #tpu.memory_space<vmem>>, %arg4: memref<1x256x128xbf16, #tpu.memory_space<vmem>>, %arg5: memref<1x1x128xf32, #tpu.memory_space<vmem>>, %arg6: memref<1x1x128xf32, #tpu.memory_space<vmem>>) attributes {dimension_semantics = [#tpu.dimension_semantics<parallel>, #tpu.dimension_semantics<arbitrary>], iteration_bounds = array<i64: 2, 1>, scalar_prefetch = 0 : i64, scratch_operands = 0 : i64, tpu.core_type = #tpu.core_type<tc>, window_params = [{transform_indices = @transform_0, window_bounds = array<i64: 1, 256, 36>}, {pipeline_mode = #tpu.pipeline_mode<synchronous>, transform_indices = @transform_1, window_bounds = array<i64: 36, 128>}, {transform_indices = @transform_2, window_bounds = array<i64: 1, 256, 128>}, {transform_indices = @transform_3, window_bounds = array<i64: 1, 1, 128>}, {transform_indices = @transform_4, window_bounds = array<i64: 1, 1, 128>}]} {
    %c0 = arith.constant 0 : index
    %c0_0 = arith.constant 0 : index
    %c0_1 = arith.constant 0 : index
    %0 = vector.load %arg2[%c0, %c0_0, %c0_1] : memref<1x256x36xbf16, #tpu.memory_space<vmem>>, vector<1x256x36xbf16>
    %1 = vector.shape_cast %0 : vector<1x256x36xbf16> to vector<256x36xbf16>
    %c0_2 = arith.constant 0 : index
    %c0_3 = arith.constant 0 : index
    %2 = vector.load %arg3[%c0_2, %c0_3] : memref<36x128xbf16, #tpu.memory_space<vmem>>, vector<36x128xbf16>
    %cst = arith.constant dense<0.000000e+00> : vector<256x128xf32>
    %3 = tpu.matmul %1, %2, %cst {dimension_numbers = #tpu.dot_dimension_numbers<[1], [0], [0], [1], [0, 0, 1, 1], [], []>} : vector<256x36xbf16>, vector<36x128xbf16>, vector<256x128xf32> -> vector<256x128xf32>
    %4 = arith.truncf %3 : vector<256x128xf32> to vector<256x128xbf16>
    %c0_4 = arith.constant 0 : index
    %c0_5 = arith.constant 0 : index
    %c0_6 = arith.constant 0 : index
    %5 = vector.load %arg4[%c0_4, %c0_5, %c0_6] : memref<1x256x128xbf16, #tpu.memory_space<vmem>>, vector<1x256x128xbf16>
    %6 = vector.shape_cast %5 : vector<1x256x128xbf16> to vector<256x128xbf16>
    %7 = vector.shape_cast %4 : vector<256x128xbf16> to vector<1x256x128xbf16>
    tpu.vector_store %arg4[%c0_4, %c0_5, %c0_6], %7 {strides = array<i32>} : memref<1x256x128xbf16, #tpu.memory_space<vmem>>, vector<1x256x128xbf16>,
    %c0_i32 = arith.constant 0 : i32
    %8 = arith.cmpi eq, %arg1, %c0_i32 : i32
    %9 = arith.extui %8 : i1 to i32
    %c0_i32_7 = arith.constant 0 : i32
    %10 = arith.cmpi ne, %9, %c0_i32_7 : i32
    scf.if %10 {
      %cst_22 = arith.constant 0.000000e+00 : f32
      %28 = vector.broadcast %cst_22 : f32 to vector<1x128xf32>
      %c0_23 = arith.constant 0 : index
      %c0_24 = arith.constant 0 : index
      %c0_25 = arith.constant 0 : index
      %29 = vector.load %arg5[%c0_23, %c0_24, %c0_25] : memref<1x1x128xf32, #tpu.memory_space<vmem>>, vector<1x1x128xf32>
      %30 = vector.shape_cast %29 : vector<1x1x128xf32> to vector<1x128xf32>
      %31 = vector.shape_cast %28 : vector<1x128xf32> to vector<1x1x128xf32>
      tpu.vector_store %arg5[%c0_23, %c0_24, %c0_25], %31 {strides = array<i32>} : memref<1x1x128xf32, #tpu.memory_space<vmem>>, vector<1x1x128xf32>,
      %cst_26 = arith.constant 0.000000e+00 : f32
      %32 = vector.broadcast %cst_26 : f32 to vector<1x128xf32>
      %c0_27 = arith.constant 0 : index
      %c0_28 = arith.constant 0 : index
      %c0_29 = arith.constant 0 : index
      %33 = vector.load %arg6[%c0_27, %c0_28, %c0_29] : memref<1x1x128xf32, #tpu.memory_space<vmem>>, vector<1x1x128xf32>
      %34 = vector.shape_cast %33 : vector<1x1x128xf32> to vector<1x128xf32>
      %35 = vector.shape_cast %32 : vector<1x128xf32> to vector<1x1x128xf32>
      tpu.vector_store %arg6[%c0_27, %c0_28, %c0_29], %35 {strides = array<i32>} : memref<1x1x128xf32, #tpu.memory_space<vmem>>, vector<1x1x128xf32>,
    } else {
    }
    %c0_8 = arith.constant 0 : index
    %c0_9 = arith.constant 0 : index
    %c0_10 = arith.constant 0 : index
    %11 = vector.load %arg5[%c0_8, %c0_9, %c0_10] : memref<1x1x128xf32, #tpu.memory_space<vmem>>, vector<1x1x128xf32>
    %12 = vector.shape_cast %11 : vector<1x1x128xf32> to vector<1x128xf32>
    %cst_11 = arith.constant dense<0.000000e+00> : vector<128xf32>
    %13 = vector.multi_reduction <add>, %3, %cst_11 [0] : vector<256x128xf32> to vector<128xf32>
    %14 = vector.shape_cast %13 : vector<128xf32> to vector<1x128xf32>
    %15 = arith.addf %12, %14 : vector<1x128xf32>
    %c0_12 = arith.constant 0 : index
    %c0_13 = arith.constant 0 : index
    %c0_14 = arith.constant 0 : index
    %16 = vector.load %arg5[%c0_12, %c0_13, %c0_14] : memref<1x1x128xf32, #tpu.memory_space<vmem>>, vector<1x1x128xf32>
    %17 = vector.shape_cast %16 : vector<1x1x128xf32> to vector<1x128xf32>
    %18 = vector.shape_cast %15 : vector<1x128xf32> to vector<1x1x128xf32>
    tpu.vector_store %arg5[%c0_12, %c0_13, %c0_14], %18 {strides = array<i32>} : memref<1x1x128xf32, #tpu.memory_space<vmem>>, vector<1x1x128xf32>,
    %c0_15 = arith.constant 0 : index
    %c0_16 = arith.constant 0 : index
    %c0_17 = arith.constant 0 : index
    %19 = vector.load %arg6[%c0_15, %c0_16, %c0_17] : memref<1x1x128xf32, #tpu.memory_space<vmem>>, vector<1x1x128xf32>
    %20 = vector.shape_cast %19 : vector<1x1x128xf32> to vector<1x128xf32>
    %21 = arith.mulf %3, %3 : vector<256x128xf32>
    %cst_18 = arith.constant dense<0.000000e+00> : vector<128xf32>
    %22 = vector.multi_reduction <add>, %21, %cst_18 [0] : vector<256x128xf32> to vector<128xf32>
    %23 = vector.shape_cast %22 : vector<128xf32> to vector<1x128xf32>
    %24 = arith.addf %20, %23 : vector<1x128xf32>
    %c0_19 = arith.constant 0 : index
    %c0_20 = arith.constant 0 : index
    %c0_21 = arith.constant 0 : index
    %25 = vector.load %arg6[%c0_19, %c0_20, %c0_21] : memref<1x1x128xf32, #tpu.memory_space<vmem>>, vector<1x1x128xf32>
    %26 = vector.shape_cast %25 : vector<1x1x128xf32> to vector<1x128xf32>
    %27 = vector.shape_cast %24 : vector<1x128xf32> to vector<1x1x128xf32>
    tpu.vector_store %arg6[%c0_19, %c0_20, %c0_21], %27 {strides = array<i32>} : memref<1x1x128xf32, #tpu.memory_space<vmem>>, vector<1x1x128xf32>,
    return
  }
  func.func @transform_0(%arg0: i32, %arg1: i32) -> (i32, i32, i32) {
    %c0_i32 = arith.constant 0 : i32
    %c0_i32_0 = arith.constant 0 : i32
    return %arg0, %arg1, %c0_i32 : i32, i32, i32
  }
  func.func @transform_1(%arg0: i32, %arg1: i32) -> (i32, i32) {
    %c0_i32 = arith.constant 0 : i32
    %c0_i32_0 = arith.constant 0 : i32
    %c0_i32_1 = arith.constant 0 : i32
    return %c0_i32, %c0_i32_0 : i32, i32
  }
  func.func @transform_2(%arg0: i32, %arg1: i32) -> (i32, i32, i32) {
    %c0_i32 = arith.constant 0 : i32
    %c0_i32_0 = arith.constant 0 : i32
    return %arg0, %arg1, %c0_i32 : i32, i32, i32
  }
  func.func @transform_3(%arg0: i32, %arg1: i32) -> (i32, i32, i32) {
    %c0_i32 = arith.constant 0 : i32
    %c0_i32_0 = arith.constant 0 : i32
    %c0_i32_1 = arith.constant 0 : i32
    return %arg0, %c0_i32, %c0_i32_0 : i32, i32, i32
  }
  func.func @transform_4(%arg0: i32, %arg1: i32) -> (i32, i32, i32) {
    %c0_i32 = arith.constant 0 : i32
    %c0_i32_0 = arith.constant 0 : i32
    %c0_i32_1 = arith.constant 0 : i32
    return %arg0, %c0_i32, %c0_i32_0 : i32, i32, i32
  }
}

</mosaic_0001>

<llo_original>
// kernel: tpu_custom_call.1
$region0: #{tpu_custom_call.1}
  #allocation0 [shape = 'u32[]', space=smem, size = 0x4, offset = 0x4, fixed_abs, tag = 'smem constant byte address 0x4 - core index']
  #allocation1 [shape = 'u32[72,128]{1,0:T(1,128)}', space=vmem, size = 0x9000, scoped, tag = 'internal scratch']
  %s0 = inlined_call_operand.vmem [shape: bf16[2,256,36], index: 0, kind: input, shape index: {}]
  %s1 = inlined_call_operand.vmem [shape: bf16[36,128], index: 1, kind: input, shape index: {}]
  %s2 = inlined_call_operand.hbm [shape: bf16[2,256,128], index: 2, kind: output, shape index: {0}]
  %s3 = inlined_call_operand.hbm [shape: f32[2,1,128], index: 3, kind: output, shape index: {1}]
  %s4 = inlined_call_operand.hbm [shape: f32[2,1,128], index: 4, kind: output, shape index: {2}]
  %5 = xla_tuple %s2, %s3, %s4
  %s6 = sld [smem:[#allocation0]]
  $region61: #{tpu_custom_call.1} parent=0
    _
  %s8 = ssub.s32 1, %s6
  %s9 = scalar_select 0, %s8, %s6
  $region1: #{tpu_custom_call.1} parent=0
    #allocation2 [shape = 'u8[131072]{0}', space=vmem, size = 0x20000, scoped, tag = 'output window, operand 0']
    #allocation3 [shape = 's32[2]{0}', space=sflag, size = 0x8, scoped, tag = 'scoped memory for tpu_custom_call.1']
    #allocation4 [shape = 'u8[1024]{0}', space=vmem, size = 0x400, scoped, tag = 'output window, operand 1']
    #allocation5 [shape = 's32[2]{0}', space=sflag, size = 0x8, scoped, tag = 'scoped memory for tpu_custom_call.1']
    #allocation6 [shape = 'u8[1024]{0}', space=vmem, size = 0x400, scoped, tag = 'output window, operand 2']
    %10 = vsyncpa [#allocation3], 0
    %s11 = scalar_lea.sflag [#allocation3], 1
    %12 = vsyncpa %s11, 0
    %13 = vsyncpa [#allocation5], 0
    %s14 = scalar_lea.sflag [#allocation5], 1
    %15 = vsyncpa %s14, 0
    loop: start=0, step=1, limit=4
    $region2: #{tpu_custom_call.1} parent=1 // loop_pre_header
      _
    $region3: #{tpu_custom_call.1} parent=1 // loop_header
      %s17 = sphi 0, %s21
      %p18 = scmp.ge.s32.totalorder %s17, 4
      %s24 = sphi 0, %s36
      %s25 = sphi 0, %s32
      %s26 = sphi 0, %s24
      %s27 = sphi 0, %s25
      %s28 = sphi 0, %s26
      %s29 = sphi 0, %s27
      %s41 = sphi 0, %s43
      %s44 = sphi 0, %s41
      %s45 = sphi 0, %s44
      %s61 = sphi 0, %s45
      %s65 = sphi 0, %s65
      %s67 = sphi 0, %s65
      %s68 = sphi 0, %s67
      %s82 = sphi 0, %s68
      %s90 = sphi 0, %s92
      %s93 = sphi 0, %s90
      %s94 = sphi 0, %s93
      %s110 = sphi 0, %s94
      %s116 = sphi 0, %s118
      %s119 = sphi 0, %s116
      %s120 = sphi 0, %s119
      %s136 = sphi 0, %s120
      %s142 = sphi 0, %s144
      %s145 = sphi 0, %s142
      %s146 = sphi 0, %s145
      %s162 = sphi 0, %s146
    $region4: #{tpu_custom_call.1} parent=1 // loop_header_branch
      %20 = sbr.rel (%p18) target = $region8
    $region5: #{tpu_custom_call.1} parent=1 // loop_body
      %s22 = ssub.s32 %s17, 1
      %s23 = ssub.s32 %s17, 2
      %s30 = sadd.s32 1, %s25
      %p31 = scmp.ge.s32.totalorder %s30, 1
      %s32 = scalar_select %p31, 0, %s30
      %s33 = sadd.s32 1, %s24
      %s34 = scalar_select %p31, %s33, %s24
      %p35 = scmp.ge.s32.totalorder %s34, 2
      %s36 = scalar_select %p35, 0, %s34
      %s37 = ssub.s32 %s24, %s36
      %s38 = ssub.s32 %s25, %s32
      %s39 = sor.u32 %s37, %s38
      %p40 = scmp.eq.s32.totalorder %s39, 0
      %s42 = sadd.s32 %s41, 1
      %s43 = scalar_select %p40, %s41, %s42
      %p46 = pneg %p40
      %p47 = scmp.eq.s32.totalorder %s17, 1
      %p48 = por %p46, %p47
      %p49 = scmp.ne.s32.totalorder %s41, %s44
      %p50 = scmp.eq.s32.totalorder %s17, 0
      %p51 = por %p49, %p50
      %p52 = scmp.ne.s32.totalorder %s41, %s44
      %p53 = scmp.eq.s32.totalorder %s22, 1
      %p54 = por %p52, %p53
      %p55 = scmp.ne.s32.totalorder %s44, %s45
      %p56 = scmp.eq.s32.totalorder %s22, 0
      %p57 = por %p55, %p56
      %p58 = scmp.ne.s32.totalorder %s44, %s45
      %p59 = scmp.eq.s32.totalorder %s23, 1
      %p60 = por %p58, %p59
      %p62 = scmp.ne.s32.totalorder %s45, %s61
      %p63 = scmp.eq.s32.totalorder %s23, 0
      %p64 = por %p62, %p63
      %s66 = sadd.s32 %s65, 1
      %p69 = scmp.eq.s32.totalorder %s17, 1
      %p70 = scmp.ne.s32.totalorder %s65, %s67
      %p71 = scmp.eq.s32.totalorder %s17, 0
      %p72 = por %p70, %p71
      %p73 = scmp.ne.s32.totalorder %s65, %s67
      %p74 = scmp.eq.s32.totalorder %s22, 1
      %p75 = por %p73, %p74
      %p76 = scmp.ne.s32.totalorder %s67, %s68
      %p77 = scmp.eq.s32.totalorder %s22, 0
      %p78 = por %p76, %p77
      %p79 = scmp.ne.s32.totalorder %s67, %s68
      %p80 = scmp.eq.s32.totalorder %s23, 1
      %p81 = por %p79, %p80
      %p83 = scmp.ne.s32.totalorder %s68, %s82
      %p84 = scmp.eq.s32.totalorder %s23, 0
      %p85 = por %p83, %p84
      %s86 = ssub.s32 %s24, %s36
      %s87 = ssub.s32 %s25, %s32
      %s88 = sor.u32 %s86, %s87
      %p89 = scmp.eq.s32.totalorder %s88, 0
      %s91 = sadd.s32 %s90, 1
      %s92 = scalar_select %p89, %s90, %s91
      %p95 = pneg %p89
      %p96 = scmp.eq.s32.totalorder %s17, 1
      %p97 = por %p95, %p96
      %p98 = scmp.ne.s32.totalorder %s90, %s93
      %p99 = scmp.eq.s32.totalorder %s17, 0
      %p100 = por %p98, %p99
      %p101 = scmp.ne.s32.totalorder %s90, %s93
      %p102 = scmp.eq.s32.totalorder %s22, 1
      %p103 = por %p101, %p102
      %p104 = scmp.ne.s32.totalorder %s93, %s94
      %p105 = scmp.eq.s32.totalorder %s22, 0
      %p106 = por %p104, %p105
      %p107 = scmp.ne.s32.totalorder %s93, %s94
      %p108 = scmp.eq.s32.totalorder %s23, 1
      %p109 = por %p107, %p108
      %p111 = scmp.ne.s32.totalorder %s94, %s110
      %p112 = scmp.eq.s32.totalorder %s23, 0
      %p113 = por %p111, %p112
      %s114 = ssub.s32 %s24, %s36
      %p115 = scmp.eq.s32.totalorder %s114, 0
      %s117 = sadd.s32 %s116, 1
      %s118 = scalar_select %p115, %s116, %s117
      %p121 = pneg %p115
      %p122 = scmp.eq.s32.totalorder %s17, 1
      %p123 = por %p121, %p122
      %p124 = scmp.ne.s32.totalorder %s116, %s119
      %p125 = scmp.eq.s32.totalorder %s17, 0
      %p126 = por %p124, %p125
      %p127 = scmp.ne.s32.totalorder %s116, %s119
      %p128 = scmp.eq.s32.totalorder %s22, 1
      %p129 = por %p127, %p128
      %p130 = scmp.ne.s32.totalorder %s119, %s120
      %p131 = scmp.eq.s32.totalorder %s22, 0
      %p132 = por %p130, %p131
      %p133 = scmp.ne.s32.totalorder %s119, %s120
      %p134 = scmp.eq.s32.totalorder %s23, 1
      %p135 = por %p133, %p134
      %p137 = scmp.ne.s32.totalorder %s120, %s136
      %p138 = scmp.eq.s32.totalorder %s23, 0
      %p139 = por %p137, %p138
      %s140 = ssub.s32 %s24, %s36
      %p141 = scmp.eq.s32.totalorder %s140, 0
      %s143 = sadd.s32 %s142, 1
      %s144 = scalar_select %p141, %s142, %s143
      %p147 = pneg %p141
      %p148 = scmp.eq.s32.totalorder %s17, 1
      %p149 = por %p147, %p148
      %p150 = scmp.ne.s32.totalorder %s142, %s145
      %p151 = scmp.eq.s32.totalorder %s17, 0
      %p152 = por %p150, %p151
      %p153 = scmp.ne.s32.totalorder %s142, %s145
      %p154 = scmp.eq.s32.totalorder %s22, 1
      %p155 = por %p153, %p154
      %p156 = scmp.ne.s32.totalorder %s145, %s146
      %p157 = scmp.eq.s32.totalorder %s22, 0
      %p158 = por %p156, %p157
      %p159 = scmp.ne.s32.totalorder %s145, %s146
      %p160 = scmp.eq.s32.totalorder %s23, 1
      %p161 = por %p159, %p160
      %p163 = scmp.ne.s32.totalorder %s146, %s162
      %p164 = scmp.eq.s32.totalorder %s23, 0
      %p165 = por %p163, %p164
      %p166 = scmp.le.s32.totalorder 1, %s17
      %p167 = scmp.lt.s32.totalorder %s17, 3
      %p168 = pnand %p166, %p167
      %p169 = pneg %p168
      // Predicated region
      $region9: #{tpu_custom_call.1} parent=5 // pred_check
        _
      $region10: #{tpu_custom_call.1} parent=5 // pred_check_branch
        %171 = sbr.rel (%p168) target = $region12
      $region11: #{tpu_custom_call.1} parent=5 // pred_region
        %s172 = ssub.s32 %s17, 1
        // Predicated region
        $region13: #{tpu_custom_call.1} parent=11 // pred_check
          %p173 = pneg %p78
        $region14: #{tpu_custom_call.1} parent=11 // pred_check_branch
          %175 = sbr.rel (%p173) target = $region16
        $region15: #{tpu_custom_call.1} parent=11 // pred_region
          _
        $region16: #{tpu_custom_call.1} parent=11 // pred_fallthru
          _
      $region12: #{tpu_custom_call.1} parent=5 // pred_fallthru
        _
      %p176 = scmp.lt.s32.totalorder %s17, 2
      // Predicated region
      $region17: #{tpu_custom_call.1} parent=5 // pred_check
        %p177 = pneg %p176
      $region18: #{tpu_custom_call.1} parent=5 // pred_check_branch
        %179 = sbr.rel (%p177) target = $region20
      $region19: #{tpu_custom_call.1} parent=5 // pred_region
        // Predicated region
        $region21: #{tpu_custom_call.1} parent=19 // pred_check
          %p180 = pneg %p51
        $region22: #{tpu_custom_call.1} parent=19 // pred_check_branch
          %182 = sbr.rel (%p180) target = $region24
        $region23: #{tpu_custom_call.1} parent=19 // pred_region
          %s183 = smul.u32 32, %s25
          %p184 = scmp.lt.s32.totalorder %s24, 1
          %s185 = scalar_select %p184, %s24, 1
          %p186 = scmp.lt.s32.totalorder %s183, 31
          %s187 = scalar_select %p186, %s183, 31
          %s188 = smul.addr %s185, 32
          %s189 = sadd.s32 %s187, %s188
          %s190 = smul.addr %s189, 4
          %s191 = scalar_lea.vmem %s0, %s190
          %s192 = smul.u32 32, %s25
        $region24: #{tpu_custom_call.1} parent=19 // pred_fallthru
          _
      $region20: #{tpu_custom_call.1} parent=5 // pred_fallthru
        _
      %p193 = scmp.le.s32.totalorder 1, %s17
      %p194 = scmp.lt.s32.totalorder %s17, 3
      %p195 = pnand %p193, %p194
      %p196 = pneg %p195
      // Predicated region
      $region25: #{tpu_custom_call.1} parent=5 // pred_check
        _
      $region26: #{tpu_custom_call.1} parent=5 // pred_check_branch
        %198 = sbr.rel (%p195) target = $region28
      $region27: #{tpu_custom_call.1} parent=5 // pred_region
        %s199 = ssub.s32 %s17, 1
        %s200 = smul.u32 32, %s27
        %p201 = scmp.lt.s32.totalorder %s26, 1
        %s202 = scalar_select %p201, %s26, 1
        %p203 = scmp.lt.s32.totalorder %s200, 31
        %s204 = scalar_select %p203, %s200, 31
        %s205 = smul.addr %s202, 32
        %s206 = sadd.s32 %s204, %s205
        %s207 = smul.addr %s206, 4
        %s208 = scalar_lea.vmem %s0, %s207
        %p209 = pneg %p57
        %p210 = pneg %p54
        %p211 = pneg %p78
        %p212 = pneg %p75
        %p213 = pneg %p106
        %p214 = pneg %p103
        %s215 = sand.u32 %s93, 1
        %s216 = scalar_lea.sflag [#allocation3], %s215
        %s217 = sand.u32 %s93, 1
        %s218 = smul.addr %s217, 128
        %s219 = scalar_lea.vmem [#allocation2], %s218
        %p220 = pneg %p132
        %p221 = pneg %p129
        %s222 = sand.u32 %s22, 1
        %s223 = scalar_lea.sflag [#allocation5], %s222
        %s224 = sand.u32 %s119, 1
        %s225 = scalar_lea.vmem [#allocation4], %s224
        %p226 = pneg %p158
        %p227 = pneg %p155
        %s228 = sand.u32 %s22, 1
        %s229 = scalar_lea.sflag [#allocation5], %s228
        %s230 = sand.u32 %s145, 1
        %s231 = scalar_lea.vmem [#allocation6], %s230
        %s232 = smul.u32 32, %s27
        %p233 = scmp.lt.s32.totalorder %s26, 1
        %s234 = scalar_select %p233, %s26, 1
        %p235 = scmp.lt.s32.totalorder %s232, 31
        %s236 = scalar_select %p235, %s232, 31
        %s237 = smul.addr %s234, 32
        %s238 = sadd.s32 %s236, %s237
        %s239 = smul.addr %s238, 4
        %s240 = scalar_lea.vmem %s0, %s239
        %s241 = smul.u32 32, %s27
        %s242 = smul.u32 32, %s27
        %v244 = vld [vmem:[%s240] sm:$0xf]
        %v245 = vld [vmem:[%s240 + $0x4] sm:$0xf]
        %v246 = vld [vmem:[%s240 + $0x8] sm:$0xf]
        %v247 = vld [vmem:[%s240 + $0xc] sm:$0xf]
        %v248 = vld [vmem:[%s240 + $0x10] sm:$0xf]
        %v249 = vld [vmem:[%s240 + $0x14] sm:$0xf]
        %v250 = vld [vmem:[%s240 + $0x18] sm:$0xf]
        %v251 = vld [vmem:[%s240 + $0x1c] sm:$0xf]
        %v252 = vld [vmem:[%s240 + $0x20] sm:$0xf]
        %v253 = vld [vmem:[%s240 + $0x24] sm:$0xf]
        %v254 = vld [vmem:[%s240 + $0x28] sm:$0xf]
        %v255 = vld [vmem:[%s240 + $0x2c] sm:$0xf]
        %v256 = vld [vmem:[%s240 + $0x30] sm:$0xf]
        %v257 = vld [vmem:[%s240 + $0x34] sm:$0xf]
        %v258 = vld [vmem:[%s240 + $0x38] sm:$0xf]
        %v259 = vld [vmem:[%s240 + $0x3c] sm:$0xf]
        %v260 = vld [vmem:[%s240 + $0x40] sm:$0xf]
        %v261 = vld [vmem:[%s240 + $0x44] sm:$0xf]
        %v262 = vld [vmem:[%s240 + $0x48] sm:$0xf]
        %v263 = vld [vmem:[%s240 + $0x4c] sm:$0xf]
        %v264 = vld [vmem:[%s240 + $0x50] sm:$0xf]
        %v265 = vld [vmem:[%s240 + $0x54] sm:$0xf]
        %v266 = vld [vmem:[%s240 + $0x58] sm:$0xf]
        %v267 = vld [vmem:[%s240 + $0x5c] sm:$0xf]
        %v268 = vld [vmem:[%s240 + $0x60] sm:$0xf]
        %v269 = vld [vmem:[%s240 + $0x64] sm:$0xf]
        %v270 = vld [vmem:[%s240 + $0x68] sm:$0xf]
        %v271 = vld [vmem:[%s240 + $0x6c] sm:$0xf]
        %v272 = vld [vmem:[%s240 + $0x70] sm:$0xf]
        %v273 = vld [vmem:[%s240 + $0x74] sm:$0xf]
        %v274 = vld [vmem:[%s240 + $0x78] sm:$0xf]
        %v275 = vld [vmem:[%s240 + $0x7c] sm:$0xf]
        %v276 = vld [vmem:[%s1] sm:$0xf]
        %v277 = vld [vmem:[%s1 + $0x4] sm:$0xf]
        %v278 = vld [vmem:[%s1 + $0x8] sm:$0xf]
        %v279 = vld [vmem:[%s1 + $0xc] sm:$0xf]
        %v280 = vld [vmem:[%s1 + $0x10] sm:$0x3]
        %v313 = vunpack.c.l.b16 %v244
        %v314 = vunpack.c.l.b16 %v245
        %v315 = vunpack.c.l.b16 %v246
        %v316 = vunpack.c.l.b16 %v247
        %v317 = vunpack.c.l.b16 %v248
        %v318 = vunpack.c.l.b16 %v249
        %v319 = vunpack.c.l.b16 %v250
        %v320 = vunpack.c.l.b16 %v251
        %v321 = vunpack.c.l.b16 %v252
        %v322 = vunpack.c.l.b16 %v253
        %v323 = vunpack.c.l.b16 %v254
        %v324 = vunpack.c.l.b16 %v255
        %v325 = vunpack.c.l.b16 %v256
        %v326 = vunpack.c.l.b16 %v257
        %v327 = vunpack.c.l.b16 %v258
        %v328 = vunpack.c.l.b16 %v259
        %v329 = vunpack.c.l.b16 %v260
        %v330 = vunpack.c.l.b16 %v261
        %v331 = vunpack.c.l.b16 %v262
        %v332 = vunpack.c.l.b16 %v263
        %v333 = vunpack.c.l.b16 %v264
        %v334 = vunpack.c.l.b16 %v265
        %v335 = vunpack.c.l.b16 %v266
        %v336 = vunpack.c.l.b16 %v267
        %v337 = vunpack.c.l.b16 %v268
        %v338 = vunpack.c.l.b16 %v269
        %v339 = vunpack.c.l.b16 %v270
        %v340 = vunpack.c.l.b16 %v271
        %v341 = vunpack.c.l.b16 %v272
        %v342 = vunpack.c.l.b16 %v273
        %v343 = vunpack.c.l.b16 %v274
        %v344 = vunpack.c.l.b16 %v275
        %v345 = vpack.c.b16 %v314, %v313
        %v346 = vpack.c.b16 %v316, %v315
        %v347 = vpack.c.b16 %v318, %v317
        %v348 = vpack.c.b16 %v320, %v319
        %v349 = vpack.c.b16 %v322, %v321
        %v350 = vpack.c.b16 %v324, %v323
        %v351 = vpack.c.b16 %v326, %v325
        %v352 = vpack.c.b16 %v328, %v327
        %v353 = vpack.c.b16 %v330, %v329
        %v354 = vpack.c.b16 %v332, %v331
        %v355 = vpack.c.b16 %v334, %v333
        %v356 = vpack.c.b16 %v336, %v335
        %v357 = vpack.c.b16 %v338, %v337
        %v358 = vpack.c.b16 %v340, %v339
        %v359 = vpack.c.b16 %v342, %v341
        %v360 = vpack.c.b16 %v344, %v343
        %v366 = vunpack.c.l.b16 %v276
        %v367 = vunpack.c.l.b16 %v277
        %v368 = vunpack.c.l.b16 %v278
        %v369 = vunpack.c.l.b16 %v279
        %v370 = vunpack.c.l.b16 %v280
        %v371 = vpack.c.b16 %v367, %v366
        %v372 = vpack.c.b16 %v369, %v368
        %v373 = vpack.c.b16 %v370, %v370
        %vm376 = vcmask 293888
        %v378 = vsel %vm376, %v345, 0
        %v381 = vsel %vm376, %v346, 0
        %v384 = vsel %vm376, %v347, 0
        %v387 = vsel %vm376, %v348, 0
        %v390 = vsel %vm376, %v349, 0
        %v393 = vsel %vm376, %v350, 0
        %v396 = vsel %vm376, %v351, 0
        %v399 = vsel %vm376, %v352, 0
        %v402 = vsel %vm376, %v353, 0
        %v405 = vsel %vm376, %v354, 0
        %v408 = vsel %vm376, %v355, 0
        %v411 = vsel %vm376, %v356, 0
        %v414 = vsel %vm376, %v357, 0
        %v417 = vsel %vm376, %v358, 0
        %v420 = vsel %vm376, %v359, 0
        %v423 = vsel %vm376, %v360, 0
        %vm425 = vcmask 1041408
        %v427 = vsel %vm425, %v373, 0
        %429 = vmatpush.bf16.msra.mxu0 0
        %430 = vmatpush.bf16.msra.mxu0 0
        %431 = vmatpush.bf16.msra.mxu0 0
        %432 = vmatpush.bf16.msra.mxu0 0
        %433 = vmatpush.bf16.msra.mxu0 0
        %434 = vmatpush.bf16.msra.mxu0 %v427
        %435 = vmatpush.bf16.msra.mxu0 %v372
        %436 = vmatpush.bf16.msra.mxu0 %v371
        %437 = vmatmul.bf16.gmra.mxu0 %v378
        %v438 = vpop.f32.mrf.mxu0
        %v439 = vadd.f32 0.0, %v438
        %v440 = vpop.f32.mrf.mxu0
        %v441 = vadd.f32 0.0, %v440
        %442 = vmatmul.bf16.gmra.mxu0 %v381
        %v443 = vpop.f32.mrf.mxu0
        %v444 = vadd.f32 0.0, %v443
        %v445 = vpop.f32.mrf.mxu0
        %v446 = vadd.f32 0.0, %v445
        %447 = vmatmul.bf16.gmra.mxu0 %v384
        %v448 = vpop.f32.mrf.mxu0
        %v449 = vadd.f32 0.0, %v448
        %v450 = vpop.f32.mrf.mxu0
        %v451 = vadd.f32 0.0, %v450
        %452 = vmatmul.bf16.gmra.mxu0 %v387
        %v453 = vpop.f32.mrf.mxu0
        %v454 = vadd.f32 0.0, %v453
        %v455 = vpop.f32.mrf.mxu0
        %v456 = vadd.f32 0.0, %v455
        %457 = vmatmul.bf16.gmra.mxu0 %v390
        %v458 = vpop.f32.mrf.mxu0
        %v459 = vadd.f32 0.0, %v458
        %v460 = vpop.f32.mrf.mxu0
        %v461 = vadd.f32 0.0, %v460
        %462 = vmatmul.bf16.gmra.mxu0 %v393
        %v463 = vpop.f32.mrf.mxu0
        %v464 = vadd.f32 0.0, %v463
        %v465 = vpop.f32.mrf.mxu0
        %v466 = vadd.f32 0.0, %v465
        %467 = vmatmul.bf16.gmra.mxu0 %v396
        %v468 = vpop.f32.mrf.mxu0
        %v469 = vadd.f32 0.0, %v468
        %v470 = vpop.f32.mrf.mxu0
        %v471 = vadd.f32 0.0, %v470
        %472 = vmatmul.bf16.gmra.mxu0 %v399
        %v473 = vpop.f32.mrf.mxu0
        %v474 = vadd.f32 0.0, %v473
        %v475 = vpop.f32.mrf.mxu0
        %v476 = vadd.f32 0.0, %v475
        %477 = vmatmul.bf16.gmra.mxu0 %v402
        %v478 = vpop.f32.mrf.mxu0
        %v479 = vadd.f32 0.0, %v478
        %v480 = vpop.f32.mrf.mxu0
        %v481 = vadd.f32 0.0, %v480
        %482 = vmatmul.bf16.gmra.mxu0 %v405
        %v483 = vpop.f32.mrf.mxu0
        %v484 = vadd.f32 0.0, %v483
        %v485 = vpop.f32.mrf.mxu0
        %v486 = vadd.f32 0.0, %v485
        %487 = vmatmul.bf16.gmra.mxu0 %v408
        %v488 = vpop.f32.mrf.mxu0
        %v489 = vadd.f32 0.0, %v488
        %v490 = vpop.f32.mrf.mxu0
        %v491 = vadd.f32 0.0, %v490
        %492 = vmatmul.bf16.gmra.mxu0 %v411
        %v493 = vpop.f32.mrf.mxu0
        %v494 = vadd.f32 0.0, %v493
        %v495 = vpop.f32.mrf.mxu0
        %v496 = vadd.f32 0.0, %v495
        %497 = vmatmul.bf16.gmra.mxu0 %v414
        %v498 = vpop.f32.mrf.mxu0
        %v499 = vadd.f32 0.0, %v498
        %v500 = vpop.f32.mrf.mxu0
        %v501 = vadd.f32 0.0, %v500
        %502 = vmatmul.bf16.gmra.mxu0 %v417
        %v503 = vpop.f32.mrf.mxu0
        %v504 = vadd.f32 0.0, %v503
        %v505 = vpop.f32.mrf.mxu0
        %v506 = vadd.f32 0.0, %v505
        %507 = vmatmul.bf16.gmra.mxu0 %v420
        %v508 = vpop.f32.mrf.mxu0
        %v509 = vadd.f32 0.0, %v508
        %v510 = vpop.f32.mrf.mxu0
        %v511 = vadd.f32 0.0, %v510
        %512 = vmatmul.bf16.gmra.mxu0 %v423
        %v513 = vpop.f32.mrf.mxu0
        %v514 = vadd.f32 0.0, %v513
        %v515 = vpop.f32.mrf.mxu0
        %v516 = vadd.f32 0.0, %v515
        %517 = vdwg.mxu0
        %v518 = vpack.c.bf16 %v439, %v439
        %v519 = vpack.c.bf16 %v441, %v441
        %v520 = vpack.c.bf16 %v444, %v444
        %v521 = vpack.c.bf16 %v446, %v446
        %v522 = vpack.c.bf16 %v449, %v449
        %v523 = vpack.c.bf16 %v451, %v451
        %v524 = vpack.c.bf16 %v454, %v454
        %v525 = vpack.c.bf16 %v456, %v456
        %v526 = vpack.c.bf16 %v459, %v459
        %v527 = vpack.c.bf16 %v461, %v461
        %v528 = vpack.c.bf16 %v464, %v464
        %v529 = vpack.c.bf16 %v466, %v466
        %v530 = vpack.c.bf16 %v469, %v469
        %v531 = vpack.c.bf16 %v471, %v471
        %v532 = vpack.c.bf16 %v474, %v474
        %v533 = vpack.c.bf16 %v476, %v476
        %v534 = vpack.c.bf16 %v479, %v479
        %v535 = vpack.c.bf16 %v481, %v481
        %v536 = vpack.c.bf16 %v484, %v484
        %v537 = vpack.c.bf16 %v486, %v486
        %v538 = vpack.c.bf16 %v489, %v489
        %v539 = vpack.c.bf16 %v491, %v491
        %v540 = vpack.c.bf16 %v494, %v494
        %v541 = vpack.c.bf16 %v496, %v496
        %v542 = vpack.c.bf16 %v499, %v499
        %v543 = vpack.c.bf16 %v501, %v501
        %v544 = vpack.c.bf16 %v504, %v504
        %v545 = vpack.c.bf16 %v506, %v506
        %v546 = vpack.c.bf16 %v509, %v509
        %v547 = vpack.c.bf16 %v511, %v511
        %v548 = vpack.c.bf16 %v514, %v514
        %v549 = vpack.c.bf16 %v516, %v516
        %550 = vst [vmem:[%s219] sm:$0xf] %v518
        %551 = vst [vmem:[%s219 + $0x4] sm:$0xf] %v519
        %552 = vst [vmem:[%s219 + $0x8] sm:$0xf] %v520
        %553 = vst [vmem:[%s219 + $0xc] sm:$0xf] %v521
        %554 = vst [vmem:[%s219 + $0x10] sm:$0xf] %v522
        %555 = vst [vmem:[%s219 + $0x14] sm:$0xf] %v523
        %556 = vst [vmem:[%s219 + $0x18] sm:$0xf] %v524
        %557 = vst [vmem:[%s219 + $0x1c] sm:$0xf] %v525
        %558 = vst [vmem:[%s219 + $0x20] sm:$0xf] %v526
        %559 = vst [vmem:[%s219 + $0x24] sm:$0xf] %v527
        %560 = vst [vmem:[%s219 + $0x28] sm:$0xf] %v528
        %561 = vst [vmem:[%s219 + $0x2c] sm:$0xf] %v529
        %562 = vst [vmem:[%s219 + $0x30] sm:$0xf] %v530
        %563 = vst [vmem:[%s219 + $0x34] sm:$0xf] %v531
        %564 = vst [vmem:[%s219 + $0x38] sm:$0xf] %v532
        %565 = vst [vmem:[%s219 + $0x3c] sm:$0xf] %v533
        %566 = vst [vmem:[%s219 + $0x40] sm:$0xf] %v534
        %567 = vst [vmem:[%s219 + $0x44] sm:$0xf] %v535
        %568 = vst [vmem:[%s219 + $0x48] sm:$0xf] %v536
        %569 = vst [vmem:[%s219 + $0x4c] sm:$0xf] %v537
        %570 = vst [vmem:[%s219 + $0x50] sm:$0xf] %v538
        %571 = vst [vmem:[%s219 + $0x54] sm:$0xf] %v539
        %572 = vst [vmem:[%s219 + $0x58] sm:$0xf] %v540
        %573 = vst [vmem:[%s219 + $0x5c] sm:$0xf] %v541
        %574 = vst [vmem:[%s219 + $0x60] sm:$0xf] %v542
        %575 = vst [vmem:[%s219 + $0x64] sm:$0xf] %v543
        %576 = vst [vmem:[%s219 + $0x68] sm:$0xf] %v544
        %577 = vst [vmem:[%s219 + $0x6c] sm:$0xf] %v545
        %578 = vst [vmem:[%s219 + $0x70] sm:$0xf] %v546
        %579 = vst [vmem:[%s219 + $0x74] sm:$0xf] %v547
        %580 = vst [vmem:[%s219 + $0x78] sm:$0xf] %v548
        %581 = vst [vmem:[%s219 + $0x7c] sm:$0xf] %v549
        %p582 = scmp.eq.s32.totalorder %s27, 0
        // Predicated region
        $region29: #{tpu_custom_call.1} parent=27 // pred_check
          %p583 = pneg %p582
        $region30: #{tpu_custom_call.1} parent=27 // pred_check_branch
          %585 = sbr.rel (%p583) target = $region32
        $region31: #{tpu_custom_call.1} parent=27 // pred_region
          %586 = vst [vmem:[%s225] sm:$0x1] 0.0
          %587 = vst [vmem:[%s231] sm:$0x1] 0.0
        $region32: #{tpu_custom_call.1} parent=27 // pred_fallthru
          _
        %v588 = vld [vmem:[%s225] sm:$0x1]
        %v589 = vadd.f32 %v439, %v441
        %v590 = vadd.f32 %v589, %v444
        %v591 = vadd.f32 %v590, %v446
        %v592 = vadd.f32 %v591, %v449
        %v593 = vadd.f32 %v592, %v451
        %v594 = vadd.f32 %v593, %v454
        %v595 = vadd.f32 %v594, %v456
        %v596 = vadd.f32 %v595, %v459
        %v597 = vadd.f32 %v596, %v461
        %v598 = vadd.f32 %v597, %v464
        %v599 = vadd.f32 %v598, %v466
        %v600 = vadd.f32 %v599, %v469
        %v601 = vadd.f32 %v600, %v471
        %v602 = vadd.f32 %v601, %v474
        %v603 = vadd.f32 %v602, %v476
        %v604 = vadd.f32 %v603, %v479
        %v605 = vadd.f32 %v604, %v481
        %v606 = vadd.f32 %v605, %v484
        %v607 = vadd.f32 %v606, %v486
        %v608 = vadd.f32 %v607, %v489
        %v609 = vadd.f32 %v608, %v491
        %v610 = vadd.f32 %v609, %v494
        %v611 = vadd.f32 %v610, %v496
        %v612 = vadd.f32 %v611, %v499
        %v613 = vadd.f32 %v612, %v501
        %v614 = vadd.f32 %v613, %v504
        %v615 = vadd.f32 %v614, %v506
        %v616 = vadd.f32 %v615, %v509
        %v617 = vadd.f32 %v616, %v511
        %v618 = vadd.f32 %v617, %v514
        %v619 = vadd.f32 %v618, %v516
        %v620 = vrot.slane %v619, 4
        %v621 = vadd.f32 %v619, %v620
        %v622 = vrot.slane %v621, 2
        %v623 = vadd.f32 %v621, %v622
        %v624 = vrot.slane %v623, 1
        %v625 = vadd.f32 %v623, %v624
        %v626 = vadd.f32 %v588, %v625
        %627 = vst [vmem:[%s225] sm:$0x1] %v626
        %v628 = vld [vmem:[%s231] sm:$0x1]
        %v629 = vmul.f32 %v439, %v439
        %v630 = vmul.f32 %v441, %v441
        %v631 = vmul.f32 %v444, %v444
        %v632 = vmul.f32 %v446, %v446
        %v633 = vmul.f32 %v449, %v449
        %v634 = vmul.f32 %v451, %v451
        %v635 = vmul.f32 %v454, %v454
        %v636 = vmul.f32 %v456, %v456
        %v637 = vmul.f32 %v459, %v459
        %v638 = vmul.f32 %v461, %v461
        %v639 = vmul.f32 %v464, %v464
        %v640 = vmul.f32 %v466, %v466
        %v641 = vmul.f32 %v469, %v469
        %v642 = vmul.f32 %v471, %v471
        %v643 = vmul.f32 %v474, %v474
        %v644 = vmul.f32 %v476, %v476
        %v645 = vmul.f32 %v479, %v479
        %v646 = vmul.f32 %v481, %v481
        %v647 = vmul.f32 %v484, %v484
        %v648 = vmul.f32 %v486, %v486
        %v649 = vmul.f32 %v489, %v489
        %v650 = vmul.f32 %v491, %v491
        %v651 = vmul.f32 %v494, %v494
        %v652 = vmul.f32 %v496, %v496
        %v653 = vmul.f32 %v499, %v499
        %v654 = vmul.f32 %v501, %v501
        %v655 = vmul.f32 %v504, %v504
        %v656 = vmul.f32 %v506, %v506
        %v657 = vmul.f32 %v509, %v509
        %v658 = vmul.f32 %v511, %v511
        %v659 = vmul.f32 %v514, %v514
        %v660 = vmul.f32 %v516, %v516
        %v661 = vadd.f32 %v629, %v630
        %v662 = vadd.f32 %v661, %v631
        %v663 = vadd.f32 %v662, %v632
        %v664 = vadd.f32 %v663, %v633
        %v665 = vadd.f32 %v664, %v634
        %v666 = vadd.f32 %v665, %v635
        %v667 = vadd.f32 %v666, %v636
        %v668 = vadd.f32 %v667, %v637
        %v669 = vadd.f32 %v668, %v638
        %v670 = vadd.f32 %v669, %v639
        %v671 = vadd.f32 %v670, %v640
        %v672 = vadd.f32 %v671, %v641
        %v673 = vadd.f32 %v672, %v642
        %v674 = vadd.f32 %v673, %v643
        %v675 = vadd.f32 %v674, %v644
        %v676 = vadd.f32 %v675, %v645
        %v677 = vadd.f32 %v676, %v646
        %v678 = vadd.f32 %v677, %v647
        %v679 = vadd.f32 %v678, %v648
        %v680 = vadd.f32 %v679, %v649
        %v681 = vadd.f32 %v680, %v650
        %v682 = vadd.f32 %v681, %v651
        %v683 = vadd.f32 %v682, %v652
        %v684 = vadd.f32 %v683, %v653
        %v685 = vadd.f32 %v684, %v654
        %v686 = vadd.f32 %v685, %v655
        %v687 = vadd.f32 %v686, %v656
        %v688 = vadd.f32 %v687, %v657
        %v689 = vadd.f32 %v688, %v658
        %v690 = vadd.f32 %v689, %v659
        %v691 = vadd.f32 %v690, %v660
        %v692 = vrot.slane %v691, 4
        %v693 = vadd.f32 %v691, %v692
        %v694 = vrot.slane %v693, 2
        %v695 = vadd.f32 %v693, %v694
        %v696 = vrot.slane %v695, 1
        %v697 = vadd.f32 %v695, %v696
        %v698 = vadd.f32 %v628, %v697
        %699 = vst [vmem:[%s231] sm:$0x1] %v698
        %s700 = sand.u32 %s93, 1
        %s701 = scalar_lea.sflag [#allocation3], %s700
        %s702 = sand.u32 %s93, 1
        %s703 = smul.addr %s702, 128
        %s704 = scalar_lea.vmem [#allocation2], %s703
        %s705 = sand.u32 %s22, 1
        %s706 = scalar_lea.sflag [#allocation5], %s705
        %s707 = sand.u32 %s119, 1
        %s708 = scalar_lea.vmem [#allocation4], %s707
        %s709 = sand.u32 %s22, 1
        %s710 = scalar_lea.sflag [#allocation5], %s709
        %s711 = sand.u32 %s145, 1
        %s712 = scalar_lea.vmem [#allocation6], %s711
        // Predicated region
        $region33: #{tpu_custom_call.1} parent=27 // pred_check
          %p713 = pneg %p103
        $region34: #{tpu_custom_call.1} parent=27 // pred_check_branch
          %715 = sbr.rel (%p713) target = $region36
        $region35: #{tpu_custom_call.1} parent=27 // pred_region
          %s716 = smul.u32 32, %s27
          %718 = vsyncadd %s701, 0
          %s719 = smul.addr %s26, 32
          %s720 = sadd.s32 %s716, %s719
          %s721 = smul.addr %s720, 4
          %s722 = scalar_lea.hbm %s2, %s721
          %s723 = sshll.u32 %s704, 4
          %s724 = int_to_ptr.vmem [resolvable:$true] %s723
          %s725 = sshll.u32 %s722, 4
          %s726 = int_to_ptr.hbm [resolvable:$true] %s725
          %731 = dma.vmem_to_hbm [thread:$0]  %s724, 2048, %s726, %s701, 64, 64, 4
        $region36: #{tpu_custom_call.1} parent=27 // pred_fallthru
          _
        // Predicated region
        $region37: #{tpu_custom_call.1} parent=27 // pred_check
          %p732 = pneg %p129
        $region38: #{tpu_custom_call.1} parent=27 // pred_check_branch
          %734 = sbr.rel (%p732) target = $region40
        $region39: #{tpu_custom_call.1} parent=27 // pred_region
          %736 = vsyncadd %s706, 0
          %s737 = scalar_lea.hbm %s3, %s26
          %s739 = sshll.u32 %s708, 4
          %s740 = int_to_ptr.vmem [resolvable:$true] %s739
          %s741 = sshll.u32 %s737, 4
          %s742 = int_to_ptr.hbm [resolvable:$true] %s741
          %744 = dma.vmem_to_hbm [thread:$0]  %s740, 16, %s742, %s706
        $region40: #{tpu_custom_call.1} parent=27 // pred_fallthru
          _
        // Predicated region
        $region41: #{tpu_custom_call.1} parent=27 // pred_check
          %p745 = pneg %p155
        $region42: #{tpu_custom_call.1} parent=27 // pred_check_branch
          %747 = sbr.rel (%p745) target = $region44
        $region43: #{tpu_custom_call.1} parent=27 // pred_region
          %749 = vsyncadd %s710, 0
          %s750 = scalar_lea.hbm %s4, %s26
          %s752 = sshll.u32 %s712, 4
          %s753 = int_to_ptr.vmem [resolvable:$true] %s752
          %s754 = sshll.u32 %s750, 4
          %s755 = int_to_ptr.hbm [resolvable:$true] %s754
          %757 = dma.vmem_to_hbm [thread:$0]  %s753, 16, %s755, %s710
        $region44: #{tpu_custom_call.1} parent=27 // pred_fallthru
          _
      $region28: #{tpu_custom_call.1} parent=5 // pred_fallthru
        _
      %p758 = scmp.le.s32.totalorder 2, %s17
      // Predicated region
      $region45: #{tpu_custom_call.1} parent=5 // pred_check
        %p759 = pneg %p758
      $region46: #{tpu_custom_call.1} parent=5 // pred_check_branch
        %761 = sbr.rel (%p759) target = $region48
      $region47: #{tpu_custom_call.1} parent=5 // pred_region
        %s762 = ssub.s32 %s17, 2
        // Predicated region
        $region49: #{tpu_custom_call.1} parent=47 // pred_check
          %p763 = pneg %p109
        $region50: #{tpu_custom_call.1} parent=47 // pred_check_branch
          %765 = sbr.rel (%p763) target = $region52
        $region51: #{tpu_custom_call.1} parent=47 // pred_region
          %s766 = sand.u32 %s94, 1
          %s767 = scalar_lea.sflag [#allocation3], %s766
          %s768 = sand.u32 %s94, 1
          %s769 = smul.addr %s768, 128
          %s770 = scalar_lea.vmem [#allocation2], %s769
          %772 = dma.done %s767, 2048
        $region52: #{tpu_custom_call.1} parent=47 // pred_fallthru
          _
        // Predicated region
        $region53: #{tpu_custom_call.1} parent=47 // pred_check
          %p773 = pneg %p135
        $region54: #{tpu_custom_call.1} parent=47 // pred_check_branch
          %775 = sbr.rel (%p773) target = $region56
        $region55: #{tpu_custom_call.1} parent=47 // pred_region
          %s776 = sand.u32 %s23, 1
          %s777 = scalar_lea.sflag [#allocation5], %s776
          %s778 = sand.u32 %s120, 1
          %s779 = scalar_lea.vmem [#allocation4], %s778
          %781 = dma.done %s777, 16
        $region56: #{tpu_custom_call.1} parent=47 // pred_fallthru
          _
        // Predicated region
        $region57: #{tpu_custom_call.1} parent=47 // pred_check
          %p782 = pneg %p161
        $region58: #{tpu_custom_call.1} parent=47 // pred_check_branch
          %784 = sbr.rel (%p782) target = $region60
        $region59: #{tpu_custom_call.1} parent=47 // pred_region
          %s785 = sand.u32 %s23, 1
          %s786 = scalar_lea.sflag [#allocation5], %s785
          %s787 = sand.u32 %s146, 1
          %s788 = scalar_lea.vmem [#allocation6], %s787
          %790 = dma.done %s786, 16
        $region60: #{tpu_custom_call.1} parent=47 // pred_fallthru
          _
      $region48: #{tpu_custom_call.1} parent=5 // pred_fallthru
        _
    $region6: #{tpu_custom_call.1} parent=1 // loop_footer
      %s21 = sadd.s32 1, %s17
    $region7: #{tpu_custom_call.1} parent=1 // loop_footer_branch
      %16 = sbr.rel target = $region3
    $region8: #{tpu_custom_call.1} parent=1 // loop_exit
      _
    %791 = vsyncpa [#allocation3], 1
    %s792 = scalar_lea.sflag [#allocation3], 1
    %793 = vsyncpa %s792, 1
    %794 = vsyncpa [#allocation5], 1
    %s795 = scalar_lea.sflag [#allocation5], 1
    %796 = vsyncpa %s795, 1

</llo_original>
